<compile_context>
chip_gen: v7x
topology: tpu7x:2x2x1
jax: 0.10.0
libtpu: 0.0.40
codegen_flags: <defaults>
</compile_context>

<pallas_src>
import functools

import jax
import jax.numpy as jnp
from jax.experimental import pallas as pl
from jax.experimental.pallas import tpu as pltpu


def _mlp_kernel(xT_ref, w1T_ref, b1_ref, w2_ref, b2_ref, oT_ref, *, bf16_tanh):
    xT = xT_ref[...]           # (F, TN)  batch on lanes
    w1T = w1T_ref[...]         # (H, F)
    b1 = b1_ref[...]           # (H, 1)
    b2 = b2_ref[...]           # (O, 1)

    f_dim = xT.shape[0]
    o_dim = oT_ref.shape[0]

    # hidden pre-activation, (H, TN)
    if f_dim == 1:
        # K=1 matmul is a rank-1 outer product -> VPU broadcast multiply (MXU would idle).
        pre = w1T * xT + b1
    else:
        pre = jnp.dot(w1T, xT, preferred_element_type=jnp.float32) + b1

    if bf16_tanh:
        # Opt-in v6e/v7x EUP fast path (~2x tanh throughput); not bit-matched to f32.
        h = jnp.tanh(pre.astype(jnp.bfloat16)).astype(jnp.float32)
    else:
        h = jnp.tanh(pre)      # EUP tanh, f32

    if o_dim == 1:
        # O=1 matmul is a weighted sublane reduction -> VPU mul + XLU sum.  w2_ref:(H,1)
        y = jnp.sum(w2_ref[...] * h, axis=0, keepdims=True)           # (1, TN)
    else:
        # General path: W2 pre-transposed to (O, H) on the host -> plain MXU dot.
        y = jnp.dot(w2_ref[...], h, preferred_element_type=jnp.float32)  # (O, TN)

    oT_ref[...] = (y + b2).astype(oT_ref.dtype)


def _pick_batch_tile(n, f, h, o, vmem_tile_budget=6 * 1024 * 1024):
    """Lane-tile size: as large as the VMEM budget allows, >=2 grid steps when possible."""
    # per-lane f32 bytes: double-buffered x/out tiles + two (H, tn) temporaries.
    bytes_per_lane = 4 * (2 * (f + o) + 2 * h)
    tn = max(128, (vmem_tile_budget // max(bytes_per_lane, 1)) // 128 * 128)
    n_lane = pl.cdiv(n, 128) * 128           # batch rounded up to lane width
    tn = min(tn, n_lane)
    if n_lane >= 256:
        # Guarantee at least 2 grid steps so v7x's two TensorCores both get work
        # and the BlockSpec pipeliner has prefetch to overlap.
        half = pl.cdiv(pl.cdiv(n_lane, 2), 128) * 128
        tn = min(tn, half)
    return tn


def net_forward(x, w1, b1, w2, b2, *, tn=None, bf16_tanh=False):
    """Pallas Net.forward: y = tanh(x @ w1 + b1) @ w2 + b2.  x:(N,F) -> (N,O)."""
    n, f = x.shape
    h_dim = w1.shape[1]
    o_dim = w2.shape[1]

    if tn is None:
        tn = _pick_batch_tile(n, f, h_dim, o_dim)
    tn = max(128, (tn // 128) * 128)
    grid = pl.cdiv(n, tn)

    # Batch-on-lanes layout, UNPADDED: no host-side zero-pad copy.  For F=1 the
    # transpose is just a reshape (same flat layout), so there is no extra HBM pass.
    x32 = x.astype(jnp.float32)
    xT = x32.reshape(1, n) if f == 1 else x32.T          # (F, N)

    w1T = w1.T.astype(jnp.float32)                       # (H, F)
    b1c = b1.reshape(h_dim, 1).astype(jnp.float32)       # (H, 1)
    # O=1 fast path wants W2 as a column for the sublane reduction; otherwise
    # pre-transpose once on the host so the kernel does a plain (O,H)@(H,TN) dot.
    w2k = (w2.reshape(h_dim, 1) if o_dim == 1 else w2.T).astype(jnp.float32)
    b2c = b2.reshape(o_dim, 1).astype(jnp.float32)       # (O, 1)

    cost = pl.CostEstimate(
        flops=2 * n * f * h_dim + 2 * n * h_dim * o_dim,
        transcendentals=n * h_dim,
        bytes_accessed=4 * (n * (f + o_dim) + f * h_dim + h_dim
                            + h_dim * o_dim + o_dim),
    )

    yT = pl.pallas_call(
        functools.partial(_mlp_kernel, bf16_tanh=bf16_tanh),
        out_shape=jax.ShapeDtypeStruct((o_dim, n), jnp.float32),
        grid_spec=pltpu.PrefetchScalarGridSpec(
            num_scalar_prefetch=0,
            grid=(grid,),
            in_specs=[
                pl.BlockSpec((f, tn), lambda i: (0, i)),           # x tile (lane-dense)
                pl.BlockSpec((h_dim, f), lambda i: (0, 0)),        # W1^T (resident)
                pl.BlockSpec((h_dim, 1), lambda i: (0, 0)),        # b1
                pl.BlockSpec(w2k.shape, lambda i: (0, 0)),         # W2 column / W2^T
                pl.BlockSpec((o_dim, 1), lambda i: (0, 0)),        # b2
            ],
            out_specs=pl.BlockSpec((o_dim, tn), lambda i: (0, i)),
        ),
        compiler_params=pltpu.CompilerParams(
            dimension_semantics=("parallel",),
            vmem_limit_bytes=32 * 1024 * 1024),
        cost_estimate=cost,
    )(xT, w1T, b1c, w2k, b2c)

    y = yT.reshape(n, 1) if o_dim == 1 else yT.T
    return y.astype(x.dtype)


def init_params(key, n_features, n_hidden, n_output, dtype=jnp.float32):
    """Deterministic init mimicking torch.nn.Linear (U[-1/sqrt(fan_in), 1/sqrt(fan_in)])."""
    k1, k2, k3, k4 = jax.random.split(key, 4)
    bound1 = 1.0 / (n_features ** 0.5)
    bound2 = 1.0 / (n_hidden ** 0.5)
    w1 = jax.random.uniform(k1, (n_features, n_hidden), dtype, -bound1, bound1)
    b1 = jax.random.uniform(k2, (1, n_hidden), dtype, -bound1, bound1)
    w2 = jax.random.uniform(k3, (n_hidden, n_output), dtype, -bound2, bound2)
    b2 = jax.random.uniform(k4, (1, n_output), dtype, -bound2, bound2)
    return w1, b1, w2, b2


if __name__ == "__main__":
    # 1) The regression MLP implied by the reference script (scalar in/out).
    N, F, H, O = 256, 1, 32, 1
    x = jnp.linspace(-1.0, 1.0, N, dtype=jnp.float32).reshape(N, F)
    w1, b1, w2, b2 = init_params(jax.random.PRNGKey(0), F, H, O)
    out = net_forward(x, w1, b1, w2, b2)
    jax.block_until_ready(out)
    ref = jnp.tanh(x @ w1 + b1) @ w2 + b2
    assert out.shape == (N, O)
    assert jnp.allclose(out, ref, atol=1e-5, rtol=1e-5)

    # 2) Exact shapes of the original torch script (N=100 -> partial tail block, no padding).
    N2, F2, H2, O2 = 100, 1, 10, 1
    x2 = jnp.linspace(-1.0, 1.0, N2, dtype=jnp.float32).reshape(N2, F2)
    p2 = init_params(jax.random.PRNGKey(1), F2, H2, O2)
    out2 = net_forward(x2, *p2)
    jax.block_until_ready(out2)
    ref2 = jnp.tanh(x2 @ p2[0] + p2[1]) @ p2[2] + p2[3]
    assert out2.shape == (N2, O2)
    assert jnp.allclose(out2, ref2, atol=1e-5, rtol=1e-5)

    # 3) General (non-degenerate) path: F>1, O>1 exercises the MXU dots + pre-transposed W2.
    #    Loose tolerance: in-kernel MXU f32 dot precision may differ slightly from the
    #    HIGHEST-precision XLA reference.
    N3, F3, H3, O3 = 192, 8, 32, 8
    x3 = jax.random.normal(jax.random.PRNGKey(2), (N3, F3), jnp.float32)
    p3 = init_params(jax.random.PRNGKey(3), F3, H3, O3)
    out3 = net_forward(x3, *p3)
    jax.block_until_ready(out3)
    hp = jax.lax.Precision.HIGHEST
    ref3 = jnp.dot(jnp.tanh(jnp.dot(x3, p3[0], precision=hp) + p3[1]), p3[2],
                   precision=hp) + p3[3]
    assert out3.shape == (N3, O3)
    assert jnp.allclose(out3, ref3, atol=1e-2, rtol=1e-2)

    print("KERNEL_OK")
</pallas_src>

<mosaic_0001>
module attributes {stable_mosaic.version = 11 : i64} {
  func.func @_mlp_kernel(%arg0: i32, %arg1: memref<1x128xf32, #tpu.memory_space<vmem>>, %arg2: memref<32x1xf32, #tpu.memory_space<vmem>>, %arg3: memref<32x1xf32, #tpu.memory_space<vmem>>, %arg4: memref<32x1xf32, #tpu.memory_space<vmem>>, %arg5: memref<1x1xf32, #tpu.memory_space<vmem>>, %arg6: memref<1x128xf32, #tpu.memory_space<vmem>>) attributes {dimension_semantics = [#tpu.dimension_semantics<parallel>], iteration_bounds = array<i64: 2>, scalar_prefetch = 0 : i64, scratch_operands = 0 : i64, tpu.core_type = #tpu.core_type<tc>, window_params = [{transform_indices = @transform_0, window_bounds = array<i64: 1, 128>}, {pipeline_mode = #tpu.pipeline_mode<synchronous>, transform_indices = @transform_1, window_bounds = array<i64: 32, 1>}, {pipeline_mode = #tpu.pipeline_mode<synchronous>, transform_indices = @transform_2, window_bounds = array<i64: 32, 1>}, {pipeline_mode = #tpu.pipeline_mode<synchronous>, transform_indices = @transform_3, window_bounds = array<i64: 32, 1>}, {pipeline_mode = #tpu.pipeline_mode<synchronous>, transform_indices = @transform_4, window_bounds = array<i64: 1, 1>}, {transform_indices = @transform_5, window_bounds = array<i64: 1, 128>}]} {
    %c0 = arith.constant 0 : index
    %c0_0 = arith.constant 0 : index
    %0 = vector.load %arg1[%c0, %c0_0] : memref<1x128xf32, #tpu.memory_space<vmem>>, vector<1x128xf32>
    %c0_1 = arith.constant 0 : index
    %c0_2 = arith.constant 0 : index
    %1 = vector.load %arg2[%c0_1, %c0_2] : memref<32x1xf32, #tpu.memory_space<vmem>>, vector<32x1xf32>
    %c0_3 = arith.constant 0 : index
    %c0_4 = arith.constant 0 : index
    %2 = vector.load %arg3[%c0_3, %c0_4] : memref<32x1xf32, #tpu.memory_space<vmem>>, vector<32x1xf32>
    %c0_5 = arith.constant 0 : index
    %c0_6 = arith.constant 0 : index
    %3 = vector.load %arg5[%c0_5, %c0_6] : memref<1x1xf32, #tpu.memory_space<vmem>>, vector<1x1xf32>
    %4 = vector.broadcast %1 : vector<32x1xf32> to vector<32x128xf32>
    %5 = vector.broadcast %0 : vector<1x128xf32> to vector<32x128xf32>
    %6 = arith.mulf %4, %5 : vector<32x128xf32>
    %7 = vector.broadcast %2 : vector<32x1xf32> to vector<32x128xf32>
    %8 = arith.addf %6, %7 : vector<32x128xf32>
    %9 = math.tanh %8 : vector<32x128xf32>
    %c0_7 = arith.constant 0 : index
    %c0_8 = arith.constant 0 : index
    %10 = vector.load %arg4[%c0_7, %c0_8] : memref<32x1xf32, #tpu.memory_space<vmem>>, vector<32x1xf32>
    %11 = vector.broadcast %10 : vector<32x1xf32> to vector<32x128xf32>
    %12 = arith.mulf %11, %9 : vector<32x128xf32>
    %cst = arith.constant dense<0.000000e+00> : vector<128xf32>
    %13 = vector.multi_reduction <add>, %12, %cst [0] : vector<32x128xf32> to vector<128xf32>
    %14 = vector.shape_cast %13 : vector<128xf32> to vector<1x128xf32>
    %15 = vector.broadcast %3 : vector<1x1xf32> to vector<1x128xf32>
    %16 = arith.addf %14, %15 : vector<1x128xf32>
    %c0_9 = arith.constant 0 : index
    %c0_10 = arith.constant 0 : index
    %17 = vector.load %arg6[%c0_9, %c0_10] : memref<1x128xf32, #tpu.memory_space<vmem>>, vector<1x128xf32>
    tpu.vector_store %arg6[%c0_9, %c0_10], %16 {strides = array<i32>} : memref<1x128xf32, #tpu.memory_space<vmem>>, vector<1x128xf32>,
    return
  }
  func.func @transform_0(%arg0: i32) -> (i32, i32) {
    %c0_i32 = arith.constant 0 : i32
    %c0_i32_0 = arith.constant 0 : i32
    return %c0_i32, %arg0 : i32, i32
  }
  func.func @transform_1(%arg0: i32) -> (i32, i32) {
    %c0_i32 = arith.constant 0 : i32
    %c0_i32_0 = arith.constant 0 : i32
    %c0_i32_1 = arith.constant 0 : i32
    return %c0_i32, %c0_i32_0 : i32, i32
  }
  func.func @transform_2(%arg0: i32) -> (i32, i32) {
    %c0_i32 = arith.constant 0 : i32
    %c0_i32_0 = arith.constant 0 : i32
    %c0_i32_1 = arith.constant 0 : i32
    return %c0_i32, %c0_i32_0 : i32, i32
  }
  func.func @transform_3(%arg0: i32) -> (i32, i32) {
    %c0_i32 = arith.constant 0 : i32
    %c0_i32_0 = arith.constant 0 : i32
    %c0_i32_1 = arith.constant 0 : i32
    return %c0_i32, %c0_i32_0 : i32, i32
  }
  func.func @transform_4(%arg0: i32) -> (i32, i32) {
    %c0_i32 = arith.constant 0 : i32
    %c0_i32_0 = arith.constant 0 : i32
    %c0_i32_1 = arith.constant 0 : i32
    return %c0_i32, %c0_i32_0 : i32, i32
  }
  func.func @transform_5(%arg0: i32) -> (i32, i32) {
    %c0_i32 = arith.constant 0 : i32
    %c0_i32_0 = arith.constant 0 : i32
    return %c0_i32, %arg0 : i32, i32
  }
}

</mosaic_0001>

<llo_original>
// kernel: tpu_custom_call.1
$region0: #{tpu_custom_call.1}
  #allocation0 [shape = 'u32[]', space=smem, size = 0x4, offset = 0x4, fixed_abs, tag = 'smem constant byte address 0x4 - core index']
  #allocation1 [shape = 'u32[144,128]{1,0:T(1,128)}', space=vmem, size = 0x12000, scoped, tag = 'internal scratch']
  #allocation2 [shape = 'f32[1,1]{1,0:T(1,128)S(1)}', space=vmem, size = 0x200, scoped, tag = 'scoped memory for tpu_custom_call.1']
  %s0 = inlined_call_operand.vmem [shape: f32[1,256], index: 0, kind: input, shape index: {}]
  %s1 = inlined_call_operand.vmem [shape: f32[32,1], index: 1, kind: input, shape index: {}]
  %s2 = inlined_call_operand.vmem [shape: f32[32,1], index: 2, kind: input, shape index: {}]
  %s3 = inlined_call_operand.vmem [shape: f32[32,1], index: 3, kind: input, shape index: {}]
  %s4 = inlined_call_operand.<no memory space> [shape: f32[1,1], index: 4, kind: input, shape index: {}]
  %s5 = inlined_call_operand.hbm [shape: f32[1,256], index: 5, kind: output, shape index: {}]
  %s6 = sld [smem:[#allocation0]]
  $region53: #{tpu_custom_call.1} parent=0
    _
  %s8 = ssub.s32 1, %s6
  %s9 = scalar_select 0, %s8, %s6
  %v10 = vstv %s4
  %11 = vst [vmem:[#allocation2] sm:$0x1] %v10
  $region1: #{tpu_custom_call.1} parent=0
    #allocation3 [shape = 'u8[1024]{0}', space=vmem, size = 0x400, scoped, tag = 'output window, operand 0']
    #allocation4 [shape = 's32[2]{0}', space=sflag, size = 0x8, scoped, tag = 'scoped memory for tpu_custom_call.1']
    %12 = vsyncpa [#allocation4], 0
    %s13 = scalar_lea.sflag [#allocation4], 1
    %14 = vsyncpa %s13, 0
    loop: start=0, step=1, limit=4
    $region2: #{tpu_custom_call.1} parent=1 // loop_pre_header
      _
    $region3: #{tpu_custom_call.1} parent=1 // loop_header
      %s16 = sphi 0, %s20
      %p17 = scmp.ge.s32.totalorder %s16, 4
      %s26 = sphi 0, %s28
      %s29 = sphi 0, %s26
      %s30 = sphi 0, %s29
      %s46 = sphi 0, %s30
      %s50 = sphi 0, %s50
      %s52 = sphi 0, %s50
      %s53 = sphi 0, %s52
      %s67 = sphi 0, %s53
      %s71 = sphi 0, %s71
      %s73 = sphi 0, %s71
      %s74 = sphi 0, %s73
      %s88 = sphi 0, %s74
      %s92 = sphi 0, %s92
      %s94 = sphi 0, %s92
      %s95 = sphi 0, %s94
      %s109 = sphi 0, %s95
      %s113 = sphi 0, %s113
      %s115 = sphi 0, %s113
      %s116 = sphi 0, %s115
      %s130 = sphi 0, %s116
      %s136 = sphi 0, %s138
      %s139 = sphi 0, %s136
      %s140 = sphi 0, %s139
      %s156 = sphi 0, %s140
    $region4: #{tpu_custom_call.1} parent=1 // loop_header_branch
      %19 = sbr.rel (%p17) target = $region8
    $region5: #{tpu_custom_call.1} parent=1 // loop_body
      %s21 = ssub.s32 %s16, 1
      %s22 = ssub.s32 %s16, 2
      %s23 = sadd.s32 %s16, 1
      %s24 = ssub.s32 %s16, %s23
      %p25 = scmp.eq.s32.totalorder %s24, 0
      %s27 = sadd.s32 %s26, 1
      %s28 = scalar_select %p25, %s26, %s27
      %p31 = pneg %p25
      %p32 = scmp.eq.s32.totalorder %s16, 1
      %p33 = por %p31, %p32
      %p34 = scmp.ne.s32.totalorder %s26, %s29
      %p35 = scmp.eq.s32.totalorder %s16, 0
      %p36 = por %p34, %p35
      %p37 = scmp.ne.s32.totalorder %s26, %s29
      %p38 = scmp.eq.s32.totalorder %s21, 1
      %p39 = por %p37, %p38
      %p40 = scmp.ne.s32.totalorder %s29, %s30
      %p41 = scmp.eq.s32.totalorder %s21, 0
      %p42 = por %p40, %p41
      %p43 = scmp.ne.s32.totalorder %s29, %s30
      %p44 = scmp.eq.s32.totalorder %s22, 1
      %p45 = por %p43, %p44
      %p47 = scmp.ne.s32.totalorder %s30, %s46
      %p48 = scmp.eq.s32.totalorder %s22, 0
      %p49 = por %p47, %p48
      %s51 = sadd.s32 %s50, 1
      %p54 = scmp.eq.s32.totalorder %s16, 1
      %p55 = scmp.ne.s32.totalorder %s50, %s52
      %p56 = scmp.eq.s32.totalorder %s16, 0
      %p57 = por %p55, %p56
      %p58 = scmp.ne.s32.totalorder %s50, %s52
      %p59 = scmp.eq.s32.totalorder %s21, 1
      %p60 = por %p58, %p59
      %p61 = scmp.ne.s32.totalorder %s52, %s53
      %p62 = scmp.eq.s32.totalorder %s21, 0
      %p63 = por %p61, %p62
      %p64 = scmp.ne.s32.totalorder %s52, %s53
      %p65 = scmp.eq.s32.totalorder %s22, 1
      %p66 = por %p64, %p65
      %p68 = scmp.ne.s32.totalorder %s53, %s67
      %p69 = scmp.eq.s32.totalorder %s22, 0
      %p70 = por %p68, %p69
      %s72 = sadd.s32 %s71, 1
      %p75 = scmp.eq.s32.totalorder %s16, 1
      %p76 = scmp.ne.s32.totalorder %s71, %s73
      %p77 = scmp.eq.s32.totalorder %s16, 0
      %p78 = por %p76, %p77
      %p79 = scmp.ne.s32.totalorder %s71, %s73
      %p80 = scmp.eq.s32.totalorder %s21, 1
      %p81 = por %p79, %p80
      %p82 = scmp.ne.s32.totalorder %s73, %s74
      %p83 = scmp.eq.s32.totalorder %s21, 0
      %p84 = por %p82, %p83
      %p85 = scmp.ne.s32.totalorder %s73, %s74
      %p86 = scmp.eq.s32.totalorder %s22, 1
      %p87 = por %p85, %p86
      %p89 = scmp.ne.s32.totalorder %s74, %s88
      %p90 = scmp.eq.s32.totalorder %s22, 0
      %p91 = por %p89, %p90
      %s93 = sadd.s32 %s92, 1
      %p96 = scmp.eq.s32.totalorder %s16, 1
      %p97 = scmp.ne.s32.totalorder %s92, %s94
      %p98 = scmp.eq.s32.totalorder %s16, 0
      %p99 = por %p97, %p98
      %p100 = scmp.ne.s32.totalorder %s92, %s94
      %p101 = scmp.eq.s32.totalorder %s21, 1
      %p102 = por %p100, %p101
      %p103 = scmp.ne.s32.totalorder %s94, %s95
      %p104 = scmp.eq.s32.totalorder %s21, 0
      %p105 = por %p103, %p104
      %p106 = scmp.ne.s32.totalorder %s94, %s95
      %p107 = scmp.eq.s32.totalorder %s22, 1
      %p108 = por %p106, %p107
      %p110 = scmp.ne.s32.totalorder %s95, %s109
      %p111 = scmp.eq.s32.totalorder %s22, 0
      %p112 = por %p110, %p111
      %s114 = sadd.s32 %s113, 1
      %p117 = scmp.eq.s32.totalorder %s16, 1
      %p118 = scmp.ne.s32.totalorder %s113, %s115
      %p119 = scmp.eq.s32.totalorder %s16, 0
      %p120 = por %p118, %p119
      %p121 = scmp.ne.s32.totalorder %s113, %s115
      %p122 = scmp.eq.s32.totalorder %s21, 1
      %p123 = por %p121, %p122
      %p124 = scmp.ne.s32.totalorder %s115, %s116
      %p125 = scmp.eq.s32.totalorder %s21, 0
      %p126 = por %p124, %p125
      %p127 = scmp.ne.s32.totalorder %s115, %s116
      %p128 = scmp.eq.s32.totalorder %s22, 1
      %p129 = por %p127, %p128
      %p131 = scmp.ne.s32.totalorder %s116, %s130
      %p132 = scmp.eq.s32.totalorder %s22, 0
      %p133 = por %p131, %p132
      %s134 = ssub.s32 %s16, %s23
      %p135 = scmp.eq.s32.totalorder %s134, 0
      %s137 = sadd.s32 %s136, 1
      %s138 = scalar_select %p135, %s136, %s137
      %p141 = pneg %p135
      %p142 = scmp.eq.s32.totalorder %s16, 1
      %p143 = por %p141, %p142
      %p144 = scmp.ne.s32.totalorder %s136, %s139
      %p145 = scmp.eq.s32.totalorder %s16, 0
      %p146 = por %p144, %p145
      %p147 = scmp.ne.s32.totalorder %s136, %s139
      %p148 = scmp.eq.s32.totalorder %s21, 1
      %p149 = por %p147, %p148
      %p150 = scmp.ne.s32.totalorder %s139, %s140
      %p151 = scmp.eq.s32.totalorder %s21, 0
      %p152 = por %p150, %p151
      %p153 = scmp.ne.s32.totalorder %s139, %s140
      %p154 = scmp.eq.s32.totalorder %s22, 1
      %p155 = por %p153, %p154
      %p157 = scmp.ne.s32.totalorder %s140, %s156
      %p158 = scmp.eq.s32.totalorder %s22, 0
      %p159 = por %p157, %p158
      %p160 = scmp.le.s32.totalorder 1, %s16
      %p161 = scmp.lt.s32.totalorder %s16, 3
      %p162 = pnand %p160, %p161
      %p163 = pneg %p162
      // Predicated region
      $region9: #{tpu_custom_call.1} parent=5 // pred_check
        _
      $region10: #{tpu_custom_call.1} parent=5 // pred_check_branch
        %165 = sbr.rel (%p162) target = $region12
      $region11: #{tpu_custom_call.1} parent=5 // pred_region
        %s166 = ssub.s32 %s16, 1
        // Predicated region
        $region13: #{tpu_custom_call.1} parent=11 // pred_check
          %p167 = pneg %p63
        $region14: #{tpu_custom_call.1} parent=11 // pred_check_branch
          %169 = sbr.rel (%p167) target = $region16
        $region15: #{tpu_custom_call.1} parent=11 // pred_region
          _
        $region16: #{tpu_custom_call.1} parent=11 // pred_fallthru
          _
        // Predicated region
        $region17: #{tpu_custom_call.1} parent=11 // pred_check
          %p170 = pneg %p84
        $region18: #{tpu_custom_call.1} parent=11 // pred_check_branch
          %172 = sbr.rel (%p170) target = $region20
        $region19: #{tpu_custom_call.1} parent=11 // pred_region
          _
        $region20: #{tpu_custom_call.1} parent=11 // pred_fallthru
          _
        // Predicated region
        $region21: #{tpu_custom_call.1} parent=11 // pred_check
          %p173 = pneg %p105
        $region22: #{tpu_custom_call.1} parent=11 // pred_check_branch
          %175 = sbr.rel (%p173) target = $region24
        $region23: #{tpu_custom_call.1} parent=11 // pred_region
          _
        $region24: #{tpu_custom_call.1} parent=11 // pred_fallthru
          _
        // Predicated region
        $region25: #{tpu_custom_call.1} parent=11 // pred_check
          %p176 = pneg %p126
        $region26: #{tpu_custom_call.1} parent=11 // pred_check_branch
          %178 = sbr.rel (%p176) target = $region28
        $region27: #{tpu_custom_call.1} parent=11 // pred_region
          _
        $region28: #{tpu_custom_call.1} parent=11 // pred_fallthru
          _
      $region12: #{tpu_custom_call.1} parent=5 // pred_fallthru
        _
      %p179 = scmp.lt.s32.totalorder %s16, 2
      // Predicated region
      $region29: #{tpu_custom_call.1} parent=5 // pred_check
        %p180 = pneg %p179
      $region30: #{tpu_custom_call.1} parent=5 // pred_check_branch
        %182 = sbr.rel (%p180) target = $region32
      $region31: #{tpu_custom_call.1} parent=5 // pred_region
        // Predicated region
        $region33: #{tpu_custom_call.1} parent=31 // pred_check
          %p183 = pneg %p36
        $region34: #{tpu_custom_call.1} parent=31 // pred_check_branch
          %185 = sbr.rel (%p183) target = $region36
        $region35: #{tpu_custom_call.1} parent=31 // pred_region
          %p186 = scmp.lt.s32.totalorder %s16, 1
          %s187 = scalar_select %p186, %s16, 1
          %s188 = scalar_lea.vmem %s0, %s187
        $region36: #{tpu_custom_call.1} parent=31 // pred_fallthru
          _
      $region32: #{tpu_custom_call.1} parent=5 // pred_fallthru
        _
      %p189 = scmp.le.s32.totalorder 1, %s16
      %p190 = scmp.lt.s32.totalorder %s16, 3
      %p191 = pnand %p189, %p190
      %p192 = pneg %p191
      // Predicated region
      $region37: #{tpu_custom_call.1} parent=5 // pred_check
        _
      $region38: #{tpu_custom_call.1} parent=5 // pred_check_branch
        %194 = sbr.rel (%p191) target = $region40
      $region39: #{tpu_custom_call.1} parent=5 // pred_region
        %s195 = ssub.s32 %s16, 1
        %p196 = scmp.lt.s32.totalorder %s21, 1
        %s197 = scalar_select %p196, %s21, 1
        %s198 = scalar_lea.vmem %s0, %s197
        %p199 = pneg %p42
        %p200 = pneg %p39
        %p201 = pneg %p63
        %p202 = pneg %p60
        %p203 = pneg %p84
        %p204 = pneg %p81
        %p205 = pneg %p105
        %p206 = pneg %p102
        %p207 = pneg %p126
        %p208 = pneg %p123
        %p209 = pneg %p152
        %p210 = pneg %p149
        %s211 = sand.u32 %s139, 1
        %s212 = scalar_lea.sflag [#allocation4], %s211
        %s213 = sand.u32 %s139, 1
        %s214 = scalar_lea.vmem [#allocation3], %s213
        %p215 = scmp.lt.s32.totalorder %s21, 1
        %s216 = scalar_select %p215, %s21, 1
        %s217 = scalar_lea.vmem %s0, %s216
        %v218 = vld [vmem:[%s217] sm:$0x1]
        %v219 = vld [vmem:[%s1] sm:$0xff]
        %v220 = vld [vmem:[%s1 + $0x8] sm:$0xff]
        %v221 = vld [vmem:[%s1 + $0x10] sm:$0xff]
        %v222 = vld [vmem:[%s1 + $0x18] sm:$0xff]
        %v223 = vld [vmem:[%s2] sm:$0xff]
        %v224 = vld [vmem:[%s2 + $0x8] sm:$0xff]
        %v225 = vld [vmem:[%s2 + $0x10] sm:$0xff]
        %v226 = vld [vmem:[%s2 + $0x18] sm:$0xff]
        %v227 = vld [vmem:[#allocation2] sm:$0x1]
        %229 = vset.pattern.permute.xlu0 0
        %230 = vperm.xlu0 %229, %v219
        %v231 = vpop.permute.xlu0 %230
        %234 = vset.pattern.permute.xlu0 0
        %235 = vperm.xlu0 %234, %v220
        %v236 = vpop.permute.xlu0 %235
        %239 = vset.pattern.permute.xlu0 0
        %240 = vperm.xlu0 %239, %v221
        %v241 = vpop.permute.xlu0 %240
        %244 = vset.pattern.permute.xlu0 0
        %245 = vperm.xlu0 %244, %v222
        %v246 = vpop.permute.xlu0 %245
        %v249 = vlaneseq
        %v250 = vshrl.u32 %v249, 7
        %v251 = vsub.s32 0, %v250
        %v252 = vrot.slane %v218, %v251
        %v254 = vmul.f32 %v231, %v252
        %v255 = vmul.f32 %v236, %v252
        %v256 = vmul.f32 %v241, %v252
        %v257 = vmul.f32 %v246, %v252
        %259 = vset.pattern.permute.xlu0 0
        %260 = vperm.xlu0 %259, %v223
        %v261 = vpop.permute.xlu0 %260
        %264 = vset.pattern.permute.xlu0 0
        %265 = vperm.xlu0 %264, %v224
        %v266 = vpop.permute.xlu0 %265
        %269 = vset.pattern.permute.xlu0 0
        %270 = vperm.xlu0 %269, %v225
        %v271 = vpop.permute.xlu0 %270
        %274 = vset.pattern.permute.xlu0 0
        %275 = vperm.xlu0 %274, %v226
        %v276 = vpop.permute.xlu0 %275
        %v278 = vadd.f32 %v254, %v261
        %v279 = vadd.f32 %v255, %v266
        %v280 = vadd.f32 %v256, %v271
        %v281 = vadd.f32 %v257, %v276
        %v282 = vtanh.pop %v278
        %v283 = vtanh.pop %v279
        %v284 = vtanh.pop %v280
        %v285 = vtanh.pop %v281
        %v286 = vld [vmem:[%s3] sm:$0xff]
        %v287 = vld [vmem:[%s3 + $0x8] sm:$0xff]
        %v288 = vld [vmem:[%s3 + $0x10] sm:$0xff]
        %v289 = vld [vmem:[%s3 + $0x18] sm:$0xff]
        %291 = vset.pattern.permute.xlu0 0
        %292 = vperm.xlu0 %291, %v286
        %v293 = vpop.permute.xlu0 %292
        %296 = vset.pattern.permute.xlu0 0
        %297 = vperm.xlu0 %296, %v287
        %v298 = vpop.permute.xlu0 %297
        %301 = vset.pattern.permute.xlu0 0
        %302 = vperm.xlu0 %301, %v288
        %v303 = vpop.permute.xlu0 %302
        %306 = vset.pattern.permute.xlu0 0
        %307 = vperm.xlu0 %306, %v289
        %v308 = vpop.permute.xlu0 %307
        %v310 = vmul.f32 %v293, %v282
        %v311 = vmul.f32 %v298, %v283
        %v312 = vmul.f32 %v303, %v284
        %v313 = vmul.f32 %v308, %v285
        %v314 = vadd.f32 %v310, %v311
        %v315 = vadd.f32 %v314, %v312
        %v316 = vadd.f32 %v315, %v313
        %v317 = vrot.slane %v316, 4
        %v318 = vadd.f32 %v316, %v317
        %v319 = vrot.slane %v318, 2
        %v320 = vadd.f32 %v318, %v319
        %v321 = vrot.slane %v320, 1
        %v322 = vadd.f32 %v320, %v321
        %324 = vset.pattern.permute.xlu0 0
        %325 = vperm.xlu0 %324, %v227
        %v326 = vpop.permute.xlu0 %325
        %v328 = vlaneseq
        %v329 = vshrl.u32 %v328, 7
        %v330 = vsub.s32 0, %v329
        %v331 = vrot.slane %v326, %v330
        %v332 = vadd.f32 %v322, %v331
        %333 = vst [vmem:[%s214] sm:$0x1] %v332
        %s334 = sand.u32 %s139, 1
        %s335 = scalar_lea.sflag [#allocation4], %s334
        %s336 = sand.u32 %s139, 1
        %s337 = scalar_lea.vmem [#allocation3], %s336
        // Predicated region
        $region41: #{tpu_custom_call.1} parent=39 // pred_check
          %p338 = pneg %p149
        $region42: #{tpu_custom_call.1} parent=39 // pred_check_branch
          %340 = sbr.rel (%p338) target = $region44
        $region43: #{tpu_custom_call.1} parent=39 // pred_region
          %s342 = ssub.s32 16, 16
          %343 = vsyncadd %s335, %s342
          %s344 = smul.addr %s21, 16
          %s345 = scalar_lea.hbm %s5, %s344
          %s347 = sshll.u32 %s337, 4
          %s348 = int_to_ptr.vmem [resolvable:$true] %s347
          %350 = dma.vmem_to_hbm [thread:$0]  %s348, 16, %s345, %s335
        $region44: #{tpu_custom_call.1} parent=39 // pred_fallthru
          _
      $region40: #{tpu_custom_call.1} parent=5 // pred_fallthru
        _
      %p351 = scmp.le.s32.totalorder 2, %s16
      // Predicated region
      $region45: #{tpu_custom_call.1} parent=5 // pred_check
        %p352 = pneg %p351
      $region46: #{tpu_custom_call.1} parent=5 // pred_check_branch
        %354 = sbr.rel (%p352) target = $region48
      $region47: #{tpu_custom_call.1} parent=5 // pred_region
        %s355 = ssub.s32 %s16, 2
        // Predicated region
        $region49: #{tpu_custom_call.1} parent=47 // pred_check
          %p356 = pneg %p155
        $region50: #{tpu_custom_call.1} parent=47 // pred_check_branch
          %358 = sbr.rel (%p356) target = $region52
        $region51: #{tpu_custom_call.1} parent=47 // pred_region
          %s359 = sand.u32 %s140, 1
          %s360 = scalar_lea.sflag [#allocation4], %s359
          %s361 = sand.u32 %s140, 1
          %s362 = scalar_lea.vmem [#allocation3], %s361
          %363 = dma.done %s360, 16
        $region52: #{tpu_custom_call.1} parent=47 // pred_fallthru
          _
      $region48: #{tpu_custom_call.1} parent=5 // pred_fallthru
        _
    $region6: #{tpu_custom_call.1} parent=1 // loop_footer
      %s20 = sadd.s32 1, %s16
    $region7: #{tpu_custom_call.1} parent=1 // loop_footer_branch
      %15 = sbr.rel target = $region3
    $region8: #{tpu_custom_call.1} parent=1 // loop_exit
      _
    %364 = vsyncpa [#allocation4], 1
    %s365 = scalar_lea.sflag [#allocation4], 1
    %366 = vsyncpa %s365, 1

</llo_original>
